<compile_context>
chip_gen: v7x
topology: tpu7x:2x2x1
jax: 0.10.0
libtpu: 0.0.40
codegen_flags: <defaults>
</compile_context>

<pallas_src>
import math

import jax
import jax.numpy as jnp
from jax.experimental import pallas as pl
from jax.experimental.pallas import tpu as pltpu


# ----------------------------------------------------------------------------
# Pallas kernel: broadcast-add one PE row onto a tile of flattened activations.
# ----------------------------------------------------------------------------
def pe_add_kernel(x_ref, pe_ref, o_ref):
    # x_ref : (TILE_ROWS, LANE) tile of flattened x
    # pe_ref: (1, LANE)         single (token-tiled) PE row, resident
    o_ref[...] = x_ref[...] + pe_ref[...]


# ----------------------------------------------------------------------------
# Buffer setup (glue, plain JAX) — mirrors nn.Module.__init__
# ----------------------------------------------------------------------------
def build_pe_buffer(seq_len: int, d_model: int) -> jnp.ndarray:
    position = jnp.arange(seq_len, dtype=jnp.float32)[:, None]          # (S_len, 1)
    div_term = jnp.exp(
        jnp.arange(0, d_model, 2, dtype=jnp.float32) * (-math.log(10000.0) / d_model)
    )                                                                    # (D/2,)
    pe = jnp.zeros((seq_len, d_model), dtype=jnp.float32)
    pe = pe.at[:, 0::2].set(jnp.sin(div_term * position))
    pe = pe.at[:, 1::2].set(jnp.cos(div_term * position))
    return pe[None, :, :]                                                # (1, S_len, D)


# ----------------------------------------------------------------------------
# Layout helpers
# ----------------------------------------------------------------------------
def _sublane_pack(dtype) -> int:
    """Rows per sublane tile: 8 for 4-byte, 16 for 2-byte, 32 for 1-byte."""
    itemsize = jnp.dtype(dtype).itemsize
    return max(8, 32 // itemsize)


def _pick_group(total_tokens: int, d_model: int,
                target_lane: int = 4096, max_lane: int = 8192) -> int:
    """Tokens packed per lane-row so lane = D*group is a wide multiple of 128.

    Uses lcm(D, 128)-based grouping (base = 128 / gcd(D, 128)) and then widens
    by powers of two toward `target_lane`, subject to total_tokens % group == 0.
    Valid only under single-row PE semantics (the same row tiles across tokens).
    """
    base = 128 // math.gcd(d_model, 128)
    if total_tokens % base != 0:
        return 1                     # fallback: full-D last dim (possibly masked)
    group = base
    while (d_model * group < target_lane
           and d_model * group * 2 <= max_lane
           and total_tokens % (group * 2) == 0):
        group *= 2
    return group


def _pick_tile_rows(rows: int, lane: int, itemsize: int, pack: int,
                    block_budget_bytes: int) -> int:
    """Row-tile size: ~2 MiB blocks, VMEM-bounded, sublane-aligned, and
    preferably an even divisor of `rows`."""
    if rows <= pack:
        return rows                                   # full extent (always legal)
    row_bytes = lane * itemsize
    max_rows = max(pack, block_budget_bytes // row_bytes)
    desired = max(pack, min(max_rows, (2 << 20) // row_bytes))
    desired = min(desired, rows)
    desired = (desired // pack) * pack
    if desired < pack:
        return rows
    # Prefer a tile that divides rows evenly (no ragged masked last block).
    t = desired
    while t >= pack:
        if rows % t == 0:
            return t
        t -= pack
    return desired                                    # cdiv grid handles the tail


# ----------------------------------------------------------------------------
# Forward wrapper (calls the Pallas kernel)
# ----------------------------------------------------------------------------
def positional_encoding_forward(x: jnp.ndarray, pe: jnp.ndarray) -> jnp.ndarray:
    """x: (B, S, D); pe: (1, seq_len, D).  Requires S < seq_len (literal int index)."""
    B, S, D = x.shape
    seq_len = pe.shape[1]
    assert S < seq_len, f"integer index pe[:, {S}, :] out of bounds for seq_len={seq_len}"

    # Literal reproduction of `self.pe[:, x.shape[1], :]` -> one row, broadcast.
    pe_row = pe[0, S, :].astype(x.dtype)                                 # (D,)

    # ---- Lane-dense 2-D view (wide, unmasked lanes) -------------------------
    total = B * S
    group = _pick_group(total, D)
    lane = D * group
    rows = total // group

    x2d = x.reshape(rows, lane)
    pe_vec = jnp.tile(pe_row, group).reshape(1, lane)

    # ---- Per-generation VMEM budget & row tiling ----------------------------
    itemsize = jnp.dtype(x.dtype).itemsize
    pack = _sublane_pack(x.dtype)
    try:
        vmem_cap = int(pltpu.get_tpu_info().vmem_capacity_bytes)
    except Exception:
        vmem_cap = 64 << 20                     # conservative (v7x per-TC VMEM)
    # Total double-buffered footprint (2x in-tile + 2x out-tile + PE row).
    footprint_budget = min(vmem_cap // 4, 16 << 20)
    block_budget = footprint_budget // 4
    # Explicit scoped-VMEM limit so the budget compiles on every generation.
    vmem_limit_bytes = int(max(32 << 20, min(vmem_cap // 2, 48 << 20)))

    tile_rows = _pick_tile_rows(rows, lane, itemsize, pack, block_budget)
    grid = (pl.cdiv(rows, tile_rows),)

    out2d = pl.pallas_call(
        pe_add_kernel,
        out_shape=jax.ShapeDtypeStruct((rows, lane), x.dtype),
        grid=grid,
        in_specs=[
            pl.BlockSpec((tile_rows, lane), lambda i: (i, 0)),  # row tiles of x
            pl.BlockSpec((1, lane), lambda i: (0, 0)),          # resident PE row
        ],
        out_specs=pl.BlockSpec((tile_rows, lane), lambda i: (i, 0)),
        input_output_aliases={0: 0},              # write back into x's buffer
        compiler_params=pltpu.CompilerParams(
            dimension_semantics=("parallel",),
            vmem_limit_bytes=vmem_limit_bytes,
        ),
    )(x2d, pe_vec)

    # TODO(synk): nn.Dropout applied with eval/inference semantics (identity);
    # training-mode stochastic dropout (pltpu.prng_seed / prng_random_bits) not
    # exercised here.
    return out2d.reshape(B, S, D)


if __name__ == "__main__":
    # Small shapes consistent with the module: d_model=32, seq_len=16 buffer,
    # input sequence length 8 (must be < seq_len for the literal integer index).
    B, S, D = 2, 8, 32
    SEQ_LEN = 16
    DROPOUT = 0.1  # unused at inference (identity)

    key = jax.random.PRNGKey(0)
    x = jax.random.normal(key, (B, S, D), dtype=jnp.float32)

    pe = build_pe_buffer(SEQ_LEN, D)

    # Pure-JAX reference of the exact forward semantics (computed BEFORE the
    # kernel call because x is donated / its buffer is aliased to the output).
    y_ref = x + pe[:, S, :][:, None, :]
    y_ref = jax.block_until_ready(y_ref)

    # Donate x so input_output_aliases={0: 0} takes effect without a defensive
    # copy (x must not be read again after this call).
    fwd = jax.jit(positional_encoding_forward, donate_argnums=(0,))
    y = fwd(x, pe)
    y = jax.block_until_ready(y)

    assert y.shape == (B, S, D)
    assert jnp.allclose(y, y_ref, atol=1e-6, rtol=1e-6)

    print("KERNEL_OK")
</pallas_src>

<mosaic_0001>
module attributes {stable_mosaic.version = 11 : i64} {
  func.func @pe_add_kernel(%arg0: i32, %arg1: memref<1x512xf32, #tpu.memory_space<vmem>>, %arg2: memref<1x512xf32, #tpu.memory_space<vmem>>, %arg3: memref<1x512xf32, #tpu.memory_space<vmem>>) attributes {dimension_semantics = [#tpu.dimension_semantics<parallel>], iteration_bounds = array<i64: 1>, scalar_prefetch = 0 : i64, scratch_operands = 0 : i64, tpu.core_type = #tpu.core_type<tc>, window_params = [{transform_indices = @transform_0, window_bounds = array<i64: 1, 512>}, {pipeline_mode = #tpu.pipeline_mode<synchronous>, transform_indices = @transform_1, window_bounds = array<i64: 1, 512>}, {transform_indices = @transform_2, window_bounds = array<i64: 1, 512>}]} {
    %c0 = arith.constant 0 : index
    %c0_0 = arith.constant 0 : index
    %0 = vector.load %arg1[%c0, %c0_0] : memref<1x512xf32, #tpu.memory_space<vmem>>, vector<1x512xf32>
    %c0_1 = arith.constant 0 : index
    %c0_2 = arith.constant 0 : index
    %1 = vector.load %arg2[%c0_1, %c0_2] : memref<1x512xf32, #tpu.memory_space<vmem>>, vector<1x512xf32>
    %2 = arith.addf %0, %1 : vector<1x512xf32>
    %c0_3 = arith.constant 0 : index
    %c0_4 = arith.constant 0 : index
    %3 = vector.load %arg3[%c0_3, %c0_4] : memref<1x512xf32, #tpu.memory_space<vmem>>, vector<1x512xf32>
    tpu.vector_store %arg3[%c0_3, %c0_4], %2 {strides = array<i32>} : memref<1x512xf32, #tpu.memory_space<vmem>>, vector<1x512xf32>,
    return
  }
  func.func @transform_0(%arg0: i32) -> (i32, i32) {
    %c0_i32 = arith.constant 0 : i32
    %c0_i32_0 = arith.constant 0 : i32
    return %arg0, %c0_i32 : i32, i32
  }
  func.func @transform_1(%arg0: i32) -> (i32, i32) {
    %c0_i32 = arith.constant 0 : i32
    %c0_i32_0 = arith.constant 0 : i32
    %c0_i32_1 = arith.constant 0 : i32
    return %c0_i32, %c0_i32_0 : i32, i32
  }
  func.func @transform_2(%arg0: i32) -> (i32, i32) {
    %c0_i32 = arith.constant 0 : i32
    %c0_i32_0 = arith.constant 0 : i32
    return %arg0, %c0_i32 : i32, i32
  }
}

</mosaic_0001>

<llo_original>
// kernel: tile.6
$region0: #{tile.6}
  #allocation0 [shape = 's32[1]{0}', space=sflag, size = 0x4, scoped, tag = 'scoped memory for tile.6']
  %s0 = inlined_call_operand.vmem [shape: f32[32], index: 0, kind: input, shape index: {}]
  %s1 = inlined_call_operand.vmem [shape: f32[16,32], index: 1, kind: output, shape index: {}]
  // Predicated region
  $region2: #{tile.6} parent=0 // pred_check
    _
  $region3: #{tile.6} parent=0 // pred_check_branch
    %3 = sbr.rel (0) target = $region5
  $region4: #{tile.6} parent=0 // pred_region
    _
  $region5: #{tile.6} parent=0 // pred_fallthru
    _
  %v4 = vld [vmem:[%s0] ss:$0 sm:$0xff]
  %5 = vst [vmem:[%s1] sm:$0xff] %v4
  %s6 = scalar_lea.vmem %s1, 8
  %7 = vst [vmem:[%s6] sm:$0xff] %v4

// kernel: tile.7
$region0: #{tile.7}
  %s0 = inlined_call_operand.vmem [shape: f32[16,32], index: 0, kind: input, shape index: {}]
  %s1 = inlined_call_operand.vmem [shape: f32[1,512], index: 1, kind: output, shape index: {}]
  $region1: #{tile.7} parent=0
    #allocation0 [shape = 'u8[16384]{0}', space=vmem, size = 0x4000, scoped, tag = 'scoped mem for output reshape']
    %v2 = vld [vmem:[%s0] ss:$4 sm:$0xf]
    %vm3 = vcmask 261120
    %4 = vst.msk [vmem:[#allocation0] ss:$8 sm:$0xf] %vm3, %v2
    %s5 = scalar_lea.vmem %s0, 3
    %v6 = vld [vmem:[%s5] ss:$4 sm:$0xf]
    %7 = vrot.lane.b32.xlu0 %v6, 96
    %v8 = vpop.permute.xlu0 %7
    %vm9 = vcmask 1048320
    %10 = vst.msk [vmem:[#allocation0] ss:$8 sm:$0xf] %vm9, %v8
    %s11 = scalar_lea.vmem %s0, 2
    %v12 = vld [vmem:[%s11] ss:$4 sm:$0xf]
    %13 = vrot.lane.b32.xlu0 %v12, 64
    %v14 = vpop.permute.xlu0 %13
    %vm15 = vcmask 785920
    %16 = vst.msk [vmem:[#allocation0] ss:$8 sm:$0xf] %vm15, %v14
    %s17 = scalar_lea.vmem %s0, 1
    %v18 = vld [vmem:[%s17] ss:$4 sm:$0xf]
    %19 = vrot.lane.b32.xlu0 %v18, 32
    %v20 = vpop.permute.xlu0 %19
    %vm21 = vcmask 523520
    %22 = vst.msk [vmem:[#allocation0] ss:$8 sm:$0xf] %vm21, %v20
    %s24 = sshllo.u32 0, 1
    %v26 = vld [vmem:[#allocation0] sm:%s24]
    %s27 = sshllo.u32 0, 1
    %28 = vst [vmem:[%s1] sm:%s27] %v26
    %s29 = scalar_lea.vmem [#allocation0], 8
    %v30 = vld [vmem:[%s29] sm:%s24]
    %s31 = sshllo.u32 0, 1
    %s32 = scalar_lea.vmem %s1, 1
    %33 = vst [vmem:[%s32] sm:%s31] %v30
    %s34 = scalar_lea.vmem [#allocation0], 16
    %v35 = vld [vmem:[%s34] sm:%s24]
    %s36 = sshllo.u32 0, 1
    %s37 = smul.addr 1, 2
    %s38 = scalar_lea.vmem %s1, %s37
    %39 = vst [vmem:[%s38] sm:%s36] %v35
    %s40 = scalar_lea.vmem [#allocation0], 24
    %v41 = vld [vmem:[%s40] sm:%s24]
    %s42 = sshllo.u32 0, 1
    %s43 = smul.addr 1, 3
    %s44 = scalar_lea.vmem %s1, %s43
    %45 = vst [vmem:[%s44] sm:%s42] %v41

// kernel: positional_encoding_forward.1
$region0: #{positional_encoding_forward.1}
  #allocation0 [shape = 'u32[]', space=smem, size = 0x4, offset = 0x4, fixed_abs, tag = 'smem constant byte address 0x4 - core index']
  #allocation1 [shape = 'u32[144,128]{1,0:T(1,128)}', space=vmem, size = 0x12000, scoped, tag = 'internal scratch']
  %s0 = inlined_call_operand.vmem [shape: f32[1,512], index: 0, kind: input, shape index: {}, may-alias: {0,2}]
  %s1 = inlined_call_operand.vmem [shape: f32[1,512], index: 1, kind: input, shape index: {}]
  %s2 = inlined_call_operand.vmem [shape: f32[1,512], index: 2, kind: output, shape index: {}, may-alias: {0,2}]
  %s3 = sld [smem:[#allocation0]]
  $region18: #{positional_encoding_forward.1} parent=0
    _
  %s5 = ssub.s32 1, %s3
  %s6 = scalar_select 0, %s5, %s3
  // Predicated region
  $region2: #{positional_encoding_forward.1} parent=0 // pred_check
    _
  $region3: #{positional_encoding_forward.1} parent=0 // pred_check_branch
    %8 = sbr.rel (0) target = $region5
  $region4: #{positional_encoding_forward.1} parent=0 // pred_region
    _
  $region5: #{positional_encoding_forward.1} parent=0 // pred_fallthru
    _
  // Predicated region
  $region6: #{positional_encoding_forward.1} parent=0 // pred_check
    _
  $region7: #{positional_encoding_forward.1} parent=0 // pred_check_branch
    %10 = sbr.rel (0) target = $region9
  $region8: #{positional_encoding_forward.1} parent=0 // pred_region
    _
  $region9: #{positional_encoding_forward.1} parent=0 // pred_fallthru
    _
  %v11 = vld [vmem:[%s0] sm:$0xf]
  %v12 = vld [vmem:[%s1] sm:$0xf]
  %v13 = vadd.f32 %v11, %v12
  %v14 = vlaneseq
  %vm15 = vcmp.ge.s32.totalorder %v14, 0
  %vm16 = vcmp.lt.s32.totalorder %v14, 512
  %vm17 = vmand %vm15, %vm16
  %18 = vst.msk [vmem:[%s2] sm:$0xf] %vm17, %v13
  // Predicated region
  $region10: #{positional_encoding_forward.1} parent=0 // pred_check
    _
  $region11: #{positional_encoding_forward.1} parent=0 // pred_check_branch
    %20 = sbr.rel (0) target = $region13
  $region12: #{positional_encoding_forward.1} parent=0 // pred_region
    _
  $region13: #{positional_encoding_forward.1} parent=0 // pred_fallthru
    _
  // Predicated region
  $region14: #{positional_encoding_forward.1} parent=0 // pred_check
    _
  $region15: #{positional_encoding_forward.1} parent=0 // pred_check_branch
    %22 = sbr.rel (0) target = $region17
  $region16: #{positional_encoding_forward.1} parent=0 // pred_region
    _
  $region17: #{positional_encoding_forward.1} parent=0 // pred_fallthru
    _

</llo_original>
